<compile_context>
chip_gen: v7x
topology: tpu7x:2x2x1
jax: 0.10.0
libtpu: 0.0.40
codegen_flags: <defaults>
</compile_context>

<pallas_src>
import functools

import jax
import jax.numpy as jnp
from jax import lax
from jax.experimental import pallas as pl
from jax.experimental.pallas import tpu as pltpu

LANES = 128


def _round_up(a, b):
    return ((a + b - 1) // b) * b


def _apply_act_kernel(out, act):
    """Activation applied inside the kernel (f32)."""
    if act == "relu":
        return jnp.maximum(out, 0.0)
    if act == "leaky":
        return jnp.where(out >= 0.0, out, 0.2 * out)  # module uses LeakyReLU(0.2)
    if act == "silu":
        # exp + approximate reciprocal both run on the EUP (keeps the divide off
        # the VPU).  NOTE: approx reciprocal -> ~1e-3 relative error on sigmoid.
        return out * pl.reciprocal(1.0 + jnp.exp(-out), approx=True)
    if act == "tanh":
        return jnp.tanh(out)
    if act == "linear":
        return out
    raise Exception("Activation not available")


def _apply_act_ref(out, act):
    """Activation for the pure-JAX reference (outside the kernel)."""
    if act == "relu":
        return jnp.maximum(out, 0.0)
    if act == "leaky":
        return jnp.where(out >= 0.0, out, 0.2 * out)
    if act == "silu":
        return out * jax.nn.sigmoid(out)
    if act == "tanh":
        return jnp.tanh(out)
    if act == "linear":
        return out
    raise Exception("Activation not available")


# ---------------------------------------------------------------------------
# kernel
# ---------------------------------------------------------------------------
def _conv_bn_act_kernel(*refs, act, residual, multi_k):
    # refs: x(tm, tk) bf16, w(tk, tn) bf16 (BN scale pre-folded), shift(1, tn) f32,
    #       [res(tm, tn) bf16], out(tm, tn), [acc(tm, tn) f32 scratch if multi_k]
    if multi_k:
        *refs, acc_ref = refs
    else:
        acc_ref = None
    if residual:
        x_ref, w_ref, shift_ref, res_ref, o_ref = refs
    else:
        x_ref, w_ref, shift_ref, o_ref = refs
        res_ref = None

    def epilogue(acc_f32):
        out = acc_f32 + shift_ref[...]
        if residual:
            out = out + res_ref[...].astype(jnp.float32)
        out = _apply_act_kernel(out, act)
        o_ref[...] = out.astype(o_ref.dtype)  # single cast at the very end

    if not multi_k:
        # Single whole-K step: no accumulator RMW, epilogue fused directly.
        epilogue(jnp.dot(x_ref[...], w_ref[...],
                         preferred_element_type=jnp.float32))
    else:
        k = pl.program_id(2)  # reduction axis (last grid axis, "arbitrary")

        @pl.when(k == 0)
        def _():
            acc_ref[...] = jnp.zeros_like(acc_ref)

        acc_ref[...] += jnp.dot(x_ref[...], w_ref[...],
                                preferred_element_type=jnp.float32)

        @pl.when(k == pl.num_programs(2) - 1)
        def _():
            epilogue(acc_ref[...])


# ---------------------------------------------------------------------------
# tile selection (generation aware, scoped-VMEM bounded)
# ---------------------------------------------------------------------------
def _working_set_bytes(tm, tn, tk, residual, out_bytes, multi_k=True):
    b = 2 * tm * tk * 2            # x tiles (bf16, double-buffered)
    b += 2 * tk * tn * 2           # weight tiles (bf16)
    b += 2 * 1 * tn * 4            # BN shift (f32)
    b += 2 * tm * tn * out_bytes   # output tiles
    if residual:
        b += 2 * tm * tn * 2       # residual tiles (bf16)
    if multi_k:
        b += tm * tn * 4           # f32 accumulator scratch
    return b


def _vmem_budget_bytes():
    """Conservative double-buffered working-set budget.

    Stays under every generation's default scoped-VMEM limit (v5e 16 MiB,
    v6e/v7x 32 MiB) so we normally never need to raise vmem_limit_bytes, and is
    re-derived from the chip's reported VMEM when available (v7x: 64 MiB).
    """
    try:
        cap = getattr(pltpu.get_tpu_info(), "vmem_capacity_bytes", 0) or 0
        if cap:
            return int(max(8 << 20, min(cap // 6, 20 << 20)))
    except Exception:
        pass
    return 12 << 20


def _choose_tiles(M, K, cout_p, residual, out_bytes, budget, tm_target=512):
    tm_target = max(LANES, (tm_target // LANES) * LANES)

    # --- N (Cout) tile: lane dense; only very wide layers get an N axis -------
    if cout_p <= 1024:
        tn = cout_p
    elif cout_p % 512 == 0:
        tn = 512
    elif cout_p % 256 == 0:
        tn = 256
    else:
        tn = LANES

    # --- M tile: >= 2 blocks on the "parallel" axis so v7x's 2 TCs both work --
    m_ceil = _round_up(M, LANES)
    tm_max = min(tm_target, m_ceil)
    if m_ceil >= 2 * LANES:
        tm_max = min(tm_max, max(LANES, (m_ceil // 2) // LANES * LANES))

    def shrink_tm(tk_):
        tm_ = tm_max
        while tm_ > LANES and _working_set_bytes(tm_, tn, tk_, residual,
                                                 out_bytes) > budget:
            tm_ -= LANES
        return tm_

    # Prefer a single whole-K reduction step: weight/shift blocks become
    # grid-invariant (fetched from HBM once) and the accumulator RMW disappears.
    tk = _round_up(K, LANES)
    tm = shrink_tm(tk)
    if _working_set_bytes(tm, tn, tk, residual, out_bytes) > budget and K > 512:
        tk = 512                      # fall back to a K reduction axis
        tm = shrink_tm(tk)
        while (_working_set_bytes(tm, tn, tk, residual, out_bytes) > budget
               and tn > LANES and (tn // 2) % LANES == 0
               and cout_p % (tn // 2) == 0):
            tn //= 2
            tm = shrink_tm(tk)
    k_pad = _round_up(K, tk)
    return tm, tn, tk, k_pad


# ---------------------------------------------------------------------------
# wrapper
# ---------------------------------------------------------------------------
def conv2d_bn_act(x, weight, bias, gamma, beta, running_mean, running_var, *,
                  stride, padding, residual=False, act="relu", eps=1e-5,
                  out_dtype=None, out_layout="NCHW", tm=512):
    """x: (N, Cin, H, W) NCHW f32.  weight: (Cout, Cin, KH, KW).

    out_layout="NHWC" / out_dtype=jnp.bfloat16 let a model-level caller skip the
    NCHW<->NHWC transposes and f32 output write between consecutive conv layers.
    """
    N, Cin, H, W = x.shape
    Cout, _, KH, KW = weight.shape
    OH = (H + 2 * padding - KH) // stride + 1
    OW = (W + 2 * padding - KW) // stride + 1
    M = N * OH * OW
    K = Cin * KH * KW
    out_dtype = x.dtype if out_dtype is None else out_dtype
    out_bytes = jnp.dtype(out_dtype).itemsize

    cout_p = _round_up(Cout, LANES)          # lane-dense output channels
    tm, tn, tk, k_pad = _choose_tiles(M, K, cout_p, residual, out_bytes,
                                      _vmem_budget_bytes(), tm_target=tm)
    m_pad = _round_up(M, tm)
    nk = k_pad // tk
    multi_k = nk > 1

    # ---- glue (plain JAX): NHWC im2col in bf16, K ordered (kh, kw, cin) ------
    x_nhwc = jnp.transpose(x, (0, 2, 3, 1))
    x_bf = x_nhwc.astype(jnp.bfloat16)
    x_sp = jnp.pad(x_bf, ((0, 0), (padding, padding), (padding, padding), (0, 0)))
    cols = [x_sp[:, kh:kh + stride * OH:stride, kw:kw + stride * OW:stride, :]
            for kh in range(KH) for kw in range(KW)]
    if k_pad > K:
        # K remainder padded with explicit zeros *inside* the one concatenate
        # (no second full-HBM pad copy, and the padded region is guaranteed
        # finite so zero weights keep it inert).
        cols.append(jnp.zeros((N, OH, OW, k_pad - K), jnp.bfloat16))
    x_col = jnp.concatenate(cols, axis=-1).reshape(M, k_pad)
    if m_pad > M:
        # Rare (only when N*OH*OW is not tile-aligned); one extra copy then.
        x_col = jnp.pad(x_col, ((0, m_pad - M), (0, 0)))

    # fold BatchNorm (eval mode): scale into the weight matrix (before the bf16
    # cast), bias/mean/beta into a per-channel shift (f32).
    scale = (gamma / jnp.sqrt(running_var + eps)).astype(jnp.float32)      # (Cout,)
    shift = ((bias - running_mean) * scale + beta).astype(jnp.float32)     # (Cout,)
    w_mat = jnp.transpose(weight, (2, 3, 1, 0)).reshape(K, Cout).astype(jnp.float32)
    w_mat = (w_mat * scale[None, :]).astype(jnp.bfloat16)
    w_mat = jnp.pad(w_mat, ((0, k_pad - K), (0, cout_p - Cout)))
    shift = jnp.pad(shift, (0, cout_p - Cout)).reshape(1, cout_p)

    inputs = [x_col, w_mat, shift]
    in_specs = [
        pl.BlockSpec((tm, tk), lambda i, j, k: (i, k)),    # patch tile (bf16)
        pl.BlockSpec((tk, tn), lambda i, j, k: (k, j)),    # scaled weight (bf16)
        pl.BlockSpec((1, tn), lambda i, j, k: (0, j)),     # BN shift (f32)
    ]
    if residual:
        assert Cin == Cout and OH == H and OW == W, "residual requires matching shapes"
        res_mat = x_bf.reshape(M, Cout)                            # bf16 residual
        res_mat = jnp.pad(res_mat, ((0, m_pad - M), (0, cout_p - Cout)))
        inputs.append(res_mat)
        in_specs.append(pl.BlockSpec((tm, tn), lambda i, j, k: (i, j)))

    scratch_shapes = [pltpu.VMEM((tm, tn), jnp.float32)] if multi_k else []

    # Raise the scoped-VMEM limit only if the chosen tiles actually need it.
    ws_bytes = _working_set_bytes(tm, tn, tk, residual, out_bytes, multi_k)
    vmem_limit = None
    if ws_bytes > (12 << 20):
        vmem_limit = int(min(max(2 * ws_bytes, 32 << 20), 40 << 20))

    kernel = functools.partial(_conv_bn_act_kernel, act=act, residual=residual,
                               multi_k=multi_k)

    out_mat = pl.pallas_call(
        kernel,
        out_shape=jax.ShapeDtypeStruct((m_pad, cout_p), out_dtype),
        grid_spec=pltpu.PrefetchScalarGridSpec(
            num_scalar_prefetch=0,
            grid=(m_pad // tm, cout_p // tn, nk),
            in_specs=in_specs,
            out_specs=pl.BlockSpec((tm, tn), lambda i, j, k: (i, j)),
            scratch_shapes=scratch_shapes,
        ),
        compiler_params=pltpu.CompilerParams(
            dimension_semantics=("parallel", "parallel", "arbitrary"),
            vmem_limit_bytes=vmem_limit),
    )(*inputs)

    out = out_mat[:M, :Cout].reshape(N, OH, OW, Cout)
    if out_layout == "NHWC":
        return out
    # Module contract is NCHW; at a model boundary pass out_layout="NHWC" to
    # skip this transpose (a full extra HBM round-trip per layer).
    return jnp.transpose(out, (0, 3, 1, 2))


# ---------------------------------------------------------------------------
# references
# ---------------------------------------------------------------------------
def _reference(x, weight, bias, gamma, beta, running_mean, running_var,
               *, stride, padding, residual, act, eps=1e-5):
    y = lax.conv_general_dilated(
        x, weight, window_strides=(stride, stride),
        padding=[(padding, padding), (padding, padding)],
        dimension_numbers=("NCHW", "OIHW", "NCHW"),
        precision=lax.Precision.HIGHEST)
    y = y + bias.reshape(1, -1, 1, 1)
    scale = gamma / jnp.sqrt(running_var + eps)
    y = (y - running_mean.reshape(1, -1, 1, 1)) * scale.reshape(1, -1, 1, 1) \
        + beta.reshape(1, -1, 1, 1)
    if residual:
        y = y + x
    return _apply_act_ref(y, act)


def _reference_bf16ops(x, weight, bias, gamma, beta, running_mean, running_var,
                       *, stride, padding, residual, act, eps=1e-5):
    """Mirrors the kernel's quantization exactly: bf16 inputs, bf16 scale-folded
    weight, bf16 residual, f32 accumulation/epilogue."""
    scale = gamma / jnp.sqrt(running_var + eps)
    shift = (bias - running_mean) * scale + beta
    x_q = x.astype(jnp.bfloat16).astype(jnp.float32)
    w_q = (weight * scale.reshape(-1, 1, 1, 1)).astype(jnp.bfloat16).astype(jnp.float32)
    y = lax.conv_general_dilated(
        x_q, w_q, window_strides=(stride, stride),
        padding=[(padding, padding), (padding, padding)],
        dimension_numbers=("NCHW", "OIHW", "NCHW"),
        precision=lax.Precision.HIGHEST)
    y = y + shift.reshape(1, -1, 1, 1)
    if residual:
        y = y + x_q
    return _apply_act_ref(y, act)


# ---------------------------------------------------------------------------
# demo / self-test
# ---------------------------------------------------------------------------
if __name__ == "__main__":
    def make_case(key, N, Cin, H, W, Cout, KH, KW):
        ks = jax.random.split(key, 7)
        x = jax.random.normal(ks[0], (N, Cin, H, W), dtype=jnp.float32)
        weight = 0.1 * jax.random.normal(ks[1], (Cout, Cin, KH, KW), dtype=jnp.float32)
        bias = 0.1 * jax.random.normal(ks[2], (Cout,), dtype=jnp.float32)
        gamma = 1.0 + 0.1 * jax.random.normal(ks[3], (Cout,), dtype=jnp.float32)
        beta = 0.1 * jax.random.normal(ks[4], (Cout,), dtype=jnp.float32)
        rmean = 0.1 * jax.random.normal(ks[5], (Cout,), dtype=jnp.float32)
        rvar = jnp.abs(1.0 + 0.1 * jax.random.normal(ks[6], (Cout,), dtype=jnp.float32))
        return x, weight, bias, gamma, beta, rmean, rvar

    def run_case(key, *, N, Cin, H, W, Cout, KH, KW, stride, padding, residual, act):
        args = make_case(key, N, Cin, H, W, Cout, KH, KW)
        out = conv2d_bn_act(*args, stride=stride, padding=padding,
                            residual=residual, act=act)
        out = jax.block_until_ready(out)
        OH = (H + 2 * padding - KH) // stride + 1
        OW = (W + 2 * padding - KW) // stride + 1
        assert out.shape == (N, Cout, OH, OW), out.shape
        # f32 reference; loose tolerance covers the bf16 operand quantization.
        ref = _reference(*args, stride=stride, padding=padding,
                         residual=residual, act=act)
        assert jnp.allclose(out, ref, atol=2.5e-2, rtol=2.5e-2), \
            float(jnp.max(jnp.abs(out - ref)))
        # tight check against a reference using the exact same quantization.
        ref_q = _reference_bf16ops(*args, stride=stride, padding=padding,
                                   residual=residual, act=act)
        assert jnp.allclose(out, ref_q, atol=1e-3, rtol=1e-3), \
            float(jnp.max(jnp.abs(out - ref_q)))

    key = jax.random.PRNGKey(0)
    k1, k2 = jax.random.split(key)

    # module config: Conv2d(cin=4, cout=4, kernel_size=3, stride=1, padding=1,
    #                       residual=True, act='relu')
    run_case(k1, N=2, Cin=4, H=16, W=16, Cout=4, KH=3, KW=3,
             stride=1, padding=1, residual=True, act="relu")
    # stride-2 / non-residual / leaky path
    run_case(k2, N=2, Cin=4, H=16, W=16, Cout=8, KH=3, KW=3,
             stride=2, padding=1, residual=False, act="leaky")

    print("KERNEL_OK")
</pallas_src>

<mosaic_0001>
module attributes {stable_mosaic.version = 11 : i64} {
  func.func @_conv_bn_act_kernel(%arg0: i32, %arg1: i32, %arg2: i32, %arg3: memref<256x128xbf16, #tpu.memory_space<vmem>>, %arg4: memref<128x128xbf16, #tpu.memory_space<vmem>>, %arg5: memref<1x128xf32, #tpu.memory_space<vmem>>, %arg6: memref<256x128xbf16, #tpu.memory_space<vmem>>, %arg7: memref<256x128xf32, #tpu.memory_space<vmem>>) attributes {dimension_semantics = [#tpu.dimension_semantics<parallel>, #tpu.dimension_semantics<parallel>, #tpu.dimension_semantics<arbitrary>], iteration_bounds = array<i64: 2, 1, 1>, scalar_prefetch = 0 : i64, scratch_operands = 0 : i64, tpu.core_type = #tpu.core_type<tc>, window_params = [{transform_indices = @transform_0, window_bounds = array<i64: 256, 128>}, {transform_indices = @transform_1, window_bounds = array<i64: 128, 128>}, {transform_indices = @transform_2, window_bounds = array<i64: 1, 128>}, {transform_indices = @transform_3, window_bounds = array<i64: 256, 128>}, {transform_indices = @transform_4, window_bounds = array<i64: 256, 128>}]} {
    %c0 = arith.constant 0 : index
    %c0_0 = arith.constant 0 : index
    %0 = vector.load %arg3[%c0, %c0_0] : memref<256x128xbf16, #tpu.memory_space<vmem>>, vector<256x128xbf16>
    %c0_1 = arith.constant 0 : index
    %c0_2 = arith.constant 0 : index
    %1 = vector.load %arg4[%c0_1, %c0_2] : memref<128x128xbf16, #tpu.memory_space<vmem>>, vector<128x128xbf16>
    %cst = arith.constant dense<0.000000e+00> : vector<256x128xf32>
    %2 = tpu.matmul %0, %1, %cst {dimension_numbers = #tpu.dot_dimension_numbers<[1], [0], [0], [1], [0, 0, 1, 1], [], []>} : vector<256x128xbf16>, vector<128x128xbf16>, vector<256x128xf32> -> vector<256x128xf32>
    %c0_3 = arith.constant 0 : index
    %c0_4 = arith.constant 0 : index
    %3 = vector.load %arg5[%c0_3, %c0_4] : memref<1x128xf32, #tpu.memory_space<vmem>>, vector<1x128xf32>
    %4 = vector.broadcast %3 : vector<1x128xf32> to vector<256x128xf32>
    %5 = arith.addf %2, %4 : vector<256x128xf32>
    %c0_5 = arith.constant 0 : index
    %c0_6 = arith.constant 0 : index
    %6 = vector.load %arg6[%c0_5, %c0_6] : memref<256x128xbf16, #tpu.memory_space<vmem>>, vector<256x128xbf16>
    %7 = arith.extf %6 : vector<256x128xbf16> to vector<256x128xf32>
    %8 = arith.addf %5, %7 : vector<256x128xf32>
    %cst_7 = arith.constant 0.000000e+00 : f32
    %9 = vector.broadcast %cst_7 : f32 to vector<256x128xf32>
    %10 = arith.maximumf %8, %9 : vector<256x128xf32>
    %c0_8 = arith.constant 0 : index
    %c0_9 = arith.constant 0 : index
    %11 = vector.load %arg7[%c0_8, %c0_9] : memref<256x128xf32, #tpu.memory_space<vmem>>, vector<256x128xf32>
    tpu.vector_store %arg7[%c0_8, %c0_9], %10 {strides = array<i32>} : memref<256x128xf32, #tpu.memory_space<vmem>>, vector<256x128xf32>,
    return
  }
  func.func @transform_0(%arg0: i32, %arg1: i32, %arg2: i32) -> (i32, i32) {
    %c0_i32 = arith.constant 0 : i32
    return %arg0, %arg2 : i32, i32
  }
  func.func @transform_1(%arg0: i32, %arg1: i32, %arg2: i32) -> (i32, i32) {
    %c0_i32 = arith.constant 0 : i32
    return %arg2, %arg1 : i32, i32
  }
  func.func @transform_2(%arg0: i32, %arg1: i32, %arg2: i32) -> (i32, i32) {
    %c0_i32 = arith.constant 0 : i32
    %c0_i32_0 = arith.constant 0 : i32
    return %c0_i32, %arg1 : i32, i32
  }
  func.func @transform_3(%arg0: i32, %arg1: i32, %arg2: i32) -> (i32, i32) {
    %c0_i32 = arith.constant 0 : i32
    return %arg0, %arg1 : i32, i32
  }
  func.func @transform_4(%arg0: i32, %arg1: i32, %arg2: i32) -> (i32, i32) {
    %c0_i32 = arith.constant 0 : i32
    return %arg0, %arg1 : i32, i32
  }
}

</mosaic_0001>

<llo_original>
// kernel: tpu_custom_call.1
$region0: #{tpu_custom_call.1}
  #allocation0 [shape = 'u32[]', space=smem, size = 0x4, offset = 0x4, fixed_abs, tag = 'smem constant byte address 0x4 - core index']
  #allocation1 [shape = 'u32[144,128]{1,0:T(1,128)}', space=vmem, size = 0x12000, scoped, tag = 'internal scratch']
  %s0 = inlined_call_operand.hbm [shape: bf16[512,128], index: 0, kind: input, shape index: {}]
  %s1 = inlined_call_operand.hbm [shape: bf16[128,128], index: 1, kind: input, shape index: {}]
  %s2 = inlined_call_operand.vmem [shape: f32[1,128], index: 2, kind: input, shape index: {}]
  %s3 = inlined_call_operand.hbm [shape: bf16[512,128], index: 3, kind: input, shape index: {}]
  %s4 = inlined_call_operand.hbm [shape: f32[512,128], index: 4, kind: output, shape index: {}]
  %s5 = sld [smem:[#allocation0]]
  $region61: #{tpu_custom_call.1} parent=0
    _
  %s7 = ssub.s32 1, %s5
  %s8 = scalar_select 0, %s7, %s5
  $region1: #{tpu_custom_call.1} parent=0
    #allocation2 [shape = 'u8[131072]{0}', space=vmem, size = 0x20000, scoped, tag = 'input window, operand 0']
    #allocation3 [shape = 's32[2]{0}', space=sflag, size = 0x8, scoped, tag = 'scoped memory for tpu_custom_call.1']
    #allocation4 [shape = 's32[2]{0}', space=sflag, size = 0x8, scoped, tag = 'scoped memory for tpu_custom_call.1']
    #allocation5 [shape = 'u8[32768]{0}', space=vmem, size = 0x8000, scoped, tag = 'input window, operand 1, single buffered']
    #allocation6 [shape = 's32[1]{0}', space=sflag, size = 0x4, scoped, tag = 'scoped memory for tpu_custom_call.1']
    #allocation7 [shape = 'u8[131072]{0}', space=vmem, size = 0x20000, scoped, tag = 'input window, operand 3']
    #allocation8 [shape = 'u8[262144]{0}', space=vmem, size = 0x40000, scoped, tag = 'output window, operand 0']
    %9 = vsyncpa [#allocation3], 0
    %s10 = scalar_lea.sflag [#allocation3], 1
    %11 = vsyncpa %s10, 0
    %12 = vsyncpa [#allocation6], 0
    %13 = vsyncpa [#allocation4], 0
    %s14 = scalar_lea.sflag [#allocation4], 1
    %15 = vsyncpa %s14, 0
    loop: start=0, step=1, limit=4
    $region2: #{tpu_custom_call.1} parent=1 // loop_pre_header
      _
    $region3: #{tpu_custom_call.1} parent=1 // loop_header
      %s17 = sphi 0, %s21
      %p18 = scmp.ge.s32.totalorder %s17, 4
      %s24 = sphi 0, %s43
      %s25 = sphi 0, %s39
      %s26 = sphi 0, %s35
      %s27 = sphi 0, %s24
      %s28 = sphi 0, %s25
      %s29 = sphi 0, %s26
      %s30 = sphi 0, %s27
      %s31 = sphi 0, %s28
      %s32 = sphi 0, %s29
      %s48 = sphi 0, %s50
      %s51 = sphi 0, %s48
      %s52 = sphi 0, %s51
      %s68 = sphi 0, %s52
      %s76 = sphi 0, %s78
      %s79 = sphi 0, %s76
      %s80 = sphi 0, %s79
      %s96 = sphi 0, %s80
      %s102 = sphi 0, %s104
      %s105 = sphi 0, %s102
      %s106 = sphi 0, %s105
      %s122 = sphi 0, %s106
      %s130 = sphi 0, %s132
      %s133 = sphi 0, %s130
      %s134 = sphi 0, %s133
      %s150 = sphi 0, %s134
      %s158 = sphi 0, %s160
      %s161 = sphi 0, %s158
      %s162 = sphi 0, %s161
      %s178 = sphi 0, %s162
    $region4: #{tpu_custom_call.1} parent=1 // loop_header_branch
      %20 = sbr.rel (%p18) target = $region8
    $region5: #{tpu_custom_call.1} parent=1 // loop_body
      %s22 = ssub.s32 %s17, 1
      %s23 = ssub.s32 %s17, 2
      %s33 = sadd.s32 1, %s26
      %p34 = scmp.ge.s32.totalorder %s33, 1
      %s35 = scalar_select %p34, 0, %s33
      %s36 = sadd.s32 1, %s25
      %s37 = scalar_select %p34, %s36, %s25
      %p38 = scmp.ge.s32.totalorder %s37, 1
      %s39 = scalar_select %p38, 0, %s37
      %s40 = sadd.s32 1, %s24
      %s41 = scalar_select %p38, %s40, %s24
      %p42 = scmp.ge.s32.totalorder %s41, 2
      %s43 = scalar_select %p42, 0, %s41
      %s44 = ssub.s32 %s24, %s43
      %s45 = ssub.s32 %s26, %s35
      %s46 = sor.u32 %s44, %s45
      %p47 = scmp.eq.s32.totalorder %s46, 0
      %s49 = sadd.s32 %s48, 1
      %s50 = scalar_select %p47, %s48, %s49
      %p53 = pneg %p47
      %p54 = scmp.eq.s32.totalorder %s17, 1
      %p55 = por %p53, %p54
      %p56 = scmp.ne.s32.totalorder %s48, %s51
      %p57 = scmp.eq.s32.totalorder %s17, 0
      %p58 = por %p56, %p57
      %p59 = scmp.ne.s32.totalorder %s48, %s51
      %p60 = scmp.eq.s32.totalorder %s22, 1
      %p61 = por %p59, %p60
      %p62 = scmp.ne.s32.totalorder %s51, %s52
      %p63 = scmp.eq.s32.totalorder %s22, 0
      %p64 = por %p62, %p63
      %p65 = scmp.ne.s32.totalorder %s51, %s52
      %p66 = scmp.eq.s32.totalorder %s23, 1
      %p67 = por %p65, %p66
      %p69 = scmp.ne.s32.totalorder %s52, %s68
      %p70 = scmp.eq.s32.totalorder %s23, 0
      %p71 = por %p69, %p70
      %s72 = ssub.s32 %s26, %s35
      %s73 = ssub.s32 %s25, %s39
      %s74 = sor.u32 %s72, %s73
      %p75 = scmp.eq.s32.totalorder %s74, 0
      %s77 = sadd.s32 %s76, 1
      %s78 = scalar_select %p75, %s76, %s77
      %p81 = pneg %p75
      %p82 = scmp.eq.s32.totalorder %s17, 1
      %p83 = por %p81, %p82
      %p84 = scmp.ne.s32.totalorder %s76, %s79
      %p85 = scmp.eq.s32.totalorder %s17, 0
      %p86 = por %p84, %p85
      %p87 = scmp.ne.s32.totalorder %s76, %s79
      %p88 = scmp.eq.s32.totalorder %s22, 1
      %p89 = por %p87, %p88
      %p90 = scmp.ne.s32.totalorder %s79, %s80
      %p91 = scmp.eq.s32.totalorder %s22, 0
      %p92 = por %p90, %p91
      %p93 = scmp.ne.s32.totalorder %s79, %s80
      %p94 = scmp.eq.s32.totalorder %s23, 1
      %p95 = por %p93, %p94
      %p97 = scmp.ne.s32.totalorder %s80, %s96
      %p98 = scmp.eq.s32.totalorder %s23, 0
      %p99 = por %p97, %p98
      %s100 = ssub.s32 %s25, %s39
      %p101 = scmp.eq.s32.totalorder %s100, 0
      %s103 = sadd.s32 %s102, 1
      %s104 = scalar_select %p101, %s102, %s103
      %p107 = pneg %p101
      %p108 = scmp.eq.s32.totalorder %s17, 1
      %p109 = por %p107, %p108
      %p110 = scmp.ne.s32.totalorder %s102, %s105
      %p111 = scmp.eq.s32.totalorder %s17, 0
      %p112 = por %p110, %p111
      %p113 = scmp.ne.s32.totalorder %s102, %s105
      %p114 = scmp.eq.s32.totalorder %s22, 1
      %p115 = por %p113, %p114
      %p116 = scmp.ne.s32.totalorder %s105, %s106
      %p117 = scmp.eq.s32.totalorder %s22, 0
      %p118 = por %p116, %p117
      %p119 = scmp.ne.s32.totalorder %s105, %s106
      %p120 = scmp.eq.s32.totalorder %s23, 1
      %p121 = por %p119, %p120
      %p123 = scmp.ne.s32.totalorder %s106, %s122
      %p124 = scmp.eq.s32.totalorder %s23, 0
      %p125 = por %p123, %p124
      %s126 = ssub.s32 %s24, %s43
      %s127 = ssub.s32 %s25, %s39
      %s128 = sor.u32 %s126, %s127
      %p129 = scmp.eq.s32.totalorder %s128, 0
      %s131 = sadd.s32 %s130, 1
      %s132 = scalar_select %p129, %s130, %s131
      %p135 = pneg %p129
      %p136 = scmp.eq.s32.totalorder %s17, 1
      %p137 = por %p135, %p136
      %p138 = scmp.ne.s32.totalorder %s130, %s133
      %p139 = scmp.eq.s32.totalorder %s17, 0
      %p140 = por %p138, %p139
      %p141 = scmp.ne.s32.totalorder %s130, %s133
      %p142 = scmp.eq.s32.totalorder %s22, 1
      %p143 = por %p141, %p142
      %p144 = scmp.ne.s32.totalorder %s133, %s134
      %p145 = scmp.eq.s32.totalorder %s22, 0
      %p146 = por %p144, %p145
      %p147 = scmp.ne.s32.totalorder %s133, %s134
      %p148 = scmp.eq.s32.totalorder %s23, 1
      %p149 = por %p147, %p148
      %p151 = scmp.ne.s32.totalorder %s134, %s150
      %p152 = scmp.eq.s32.totalorder %s23, 0
      %p153 = por %p151, %p152
      %s154 = ssub.s32 %s24, %s43
      %s155 = ssub.s32 %s25, %s39
      %s156 = sor.u32 %s154, %s155
      %p157 = scmp.eq.s32.totalorder %s156, 0
      %s159 = sadd.s32 %s158, 1
      %s160 = scalar_select %p157, %s158, %s159
      %p163 = pneg %p157
      %p164 = scmp.eq.s32.totalorder %s17, 1
      %p165 = por %p163, %p164
      %p166 = scmp.ne.s32.totalorder %s158, %s161
      %p167 = scmp.eq.s32.totalorder %s17, 0
      %p168 = por %p166, %p167
      %p169 = scmp.ne.s32.totalorder %s158, %s161
      %p170 = scmp.eq.s32.totalorder %s22, 1
      %p171 = por %p169, %p170
      %p172 = scmp.ne.s32.totalorder %s161, %s162
      %p173 = scmp.eq.s32.totalorder %s22, 0
      %p174 = por %p172, %p173
      %p175 = scmp.ne.s32.totalorder %s161, %s162
      %p176 = scmp.eq.s32.totalorder %s23, 1
      %p177 = por %p175, %p176
      %p179 = scmp.ne.s32.totalorder %s162, %s178
      %p180 = scmp.eq.s32.totalorder %s23, 0
      %p181 = por %p179, %p180
      %p182 = scmp.le.s32.totalorder 1, %s17
      %p183 = scmp.lt.s32.totalorder %s17, 3
      %p184 = pnand %p182, %p183
      %p185 = pneg %p184
      // Predicated region
      $region9: #{tpu_custom_call.1} parent=5 // pred_check
        _
      $region10: #{tpu_custom_call.1} parent=5 // pred_check_branch
        %187 = sbr.rel (%p184) target = $region12
      $region11: #{tpu_custom_call.1} parent=5 // pred_region
        %s188 = ssub.s32 %s17, 1
        // Predicated region
        $region13: #{tpu_custom_call.1} parent=11 // pred_check
          %p189 = pneg %p92
        $region14: #{tpu_custom_call.1} parent=11 // pred_check_branch
          %191 = sbr.rel (%p189) target = $region16
        $region15: #{tpu_custom_call.1} parent=11 // pred_region
          %s192 = smul.u32 16, %s29
          %s194 = ssub.s32 1024, 1024
          %195 = vsyncadd [#allocation6], %s194
          %s196 = sadd.s32 %s28, %s192
          %s197 = smul.addr %s196, 64
          %s198 = scalar_lea.hbm %s1, %s197
          %s199 = sshll.u32 [#allocation5], 4
          %s200 = int_to_ptr.vmem [resolvable:$true] %s199
          %205 = dma.hbm_to_vmem [thread:$0]  %s198, 1024, %s200, [#allocation6], 64, 64, 4
        $region16: #{tpu_custom_call.1} parent=11 // pred_fallthru
          _
        // Predicated region
        $region17: #{tpu_custom_call.1} parent=11 // pred_check
          %p206 = pneg %p118
        $region18: #{tpu_custom_call.1} parent=11 // pred_check_branch
          %208 = sbr.rel (%p206) target = $region20
        $region19: #{tpu_custom_call.1} parent=11 // pred_region
          %p209 = scmp.lt.s32.totalorder %s28, 0
          %s210 = scalar_select %p209, %s28, 0
          %s211 = scalar_lea.vmem %s2, %s210
        $region20: #{tpu_custom_call.1} parent=11 // pred_fallthru
          _
      $region12: #{tpu_custom_call.1} parent=5 // pred_fallthru
        _
      %p212 = scmp.lt.s32.totalorder %s17, 2
      // Predicated region
      $region21: #{tpu_custom_call.1} parent=5 // pred_check
        %p213 = pneg %p212
      $region22: #{tpu_custom_call.1} parent=5 // pred_check_branch
        %215 = sbr.rel (%p213) target = $region24
      $region23: #{tpu_custom_call.1} parent=5 // pred_region
        // Predicated region
        $region25: #{tpu_custom_call.1} parent=23 // pred_check
          %p216 = pneg %p58
        $region26: #{tpu_custom_call.1} parent=23 // pred_check_branch
          %218 = sbr.rel (%p216) target = $region28
        $region27: #{tpu_custom_call.1} parent=23 // pred_region
          %s219 = sand.u32 %s17, 1
          %s220 = scalar_lea.sflag [#allocation3], %s219
          %s221 = sand.u32 %s48, 1
          %s222 = smul.addr %s221, 128
          %s223 = scalar_lea.vmem [#allocation2], %s222
          %s224 = smul.u32 32, %s24
          %s226 = ssub.s32 2048, 2048
          %227 = vsyncadd %s220, %s226
          %s228 = sadd.s32 %s26, %s224
          %s229 = smul.addr %s228, 64
          %s230 = scalar_lea.hbm %s0, %s229
          %s231 = sshll.u32 %s223, 4
          %s232 = int_to_ptr.vmem [resolvable:$true] %s231
          %237 = dma.hbm_to_vmem [thread:$0]  %s230, 2048, %s232, %s220, 64, 64, 4
        $region28: #{tpu_custom_call.1} parent=23 // pred_fallthru
          _
        // Predicated region
        $region29: #{tpu_custom_call.1} parent=23 // pred_check
          %p238 = pneg %p140
        $region30: #{tpu_custom_call.1} parent=23 // pred_check_branch
          %240 = sbr.rel (%p238) target = $region32
        $region31: #{tpu_custom_call.1} parent=23 // pred_region
          %s241 = sand.u32 %s17, 1
          %s242 = scalar_lea.sflag [#allocation3], %s241
          %s243 = sand.u32 %s130, 1
          %s244 = smul.addr %s243, 128
          %s245 = scalar_lea.vmem [#allocation7], %s244
          %s246 = smul.u32 32, %s24
          %s248 = ssub.s32 2048, 2048
          %249 = vsyncadd %s242, %s248
          %s250 = sadd.s32 %s25, %s246
          %s251 = smul.addr %s250, 64
          %s252 = scalar_lea.hbm %s3, %s251
          %s253 = sshll.u32 %s245, 4
          %s254 = int_to_ptr.vmem [resolvable:$true] %s253
          %259 = dma.hbm_to_vmem [thread:$0]  %s252, 2048, %s254, %s242, 64, 64, 4
        $region32: #{tpu_custom_call.1} parent=23 // pred_fallthru
          _
      $region24: #{tpu_custom_call.1} parent=5 // pred_fallthru
        _
      %p260 = scmp.le.s32.totalorder 1, %s17
      %p261 = scmp.lt.s32.totalorder %s17, 3
      %p262 = pnand %p260, %p261
      %p263 = pneg %p262
      // Predicated region
      $region33: #{tpu_custom_call.1} parent=5 // pred_check
        _
      $region34: #{tpu_custom_call.1} parent=5 // pred_check_branch
        %265 = sbr.rel (%p262) target = $region36
      $region35: #{tpu_custom_call.1} parent=5 // pred_region
        %s266 = ssub.s32 %s17, 1
        %s267 = sand.u32 %s22, 1
        %s268 = scalar_lea.sflag [#allocation3], %s267
        %s269 = sand.u32 %s51, 1
        %s270 = smul.addr %s269, 128
        %s271 = scalar_lea.vmem [#allocation2], %s270
        // Predicated region
        $region37: #{tpu_custom_call.1} parent=35 // pred_check
          %p272 = pneg %p64
        $region38: #{tpu_custom_call.1} parent=35 // pred_check_branch
          %274 = sbr.rel (%p272) target = $region40
        $region39: #{tpu_custom_call.1} parent=35 // pred_region
          %275 = dma.done %s268, 2048
        $region40: #{tpu_custom_call.1} parent=35 // pred_fallthru
          _
        // Predicated region
        $region41: #{tpu_custom_call.1} parent=35 // pred_check
          %p276 = pneg %p92
        $region42: #{tpu_custom_call.1} parent=35 // pred_check_branch
          %278 = sbr.rel (%p276) target = $region44
        $region43: #{tpu_custom_call.1} parent=35 // pred_region
          %279 = dma.done [#allocation6], 1024
        $region44: #{tpu_custom_call.1} parent=35 // pred_fallthru
          _
        %s280 = sand.u32 %s22, 1
        %s281 = scalar_lea.sflag [#allocation3], %s280
        %s282 = sand.u32 %s133, 1
        %s283 = smul.addr %s282, 128
        %s284 = scalar_lea.vmem [#allocation7], %s283
        // Predicated region
        $region45: #{tpu_custom_call.1} parent=35 // pred_check
          %p285 = pneg %p146
        $region46: #{tpu_custom_call.1} parent=35 // pred_check_branch
          %287 = sbr.rel (%p285) target = $region48
        $region47: #{tpu_custom_call.1} parent=35 // pred_region
          %288 = dma.done %s281, 2048
        $region48: #{tpu_custom_call.1} parent=35 // pred_fallthru
          _
        %s289 = sand.u32 %s22, 1
        %s290 = scalar_lea.sflag [#allocation3], %s289
        %s291 = sand.u32 %s51, 1
        %s292 = smul.addr %s291, 128
        %s293 = scalar_lea.vmem [#allocation2], %s292
        %p294 = pneg %p64
        %p295 = pneg %p61
        %p296 = pneg %p92
        %p297 = pneg %p89
        %p298 = scmp.lt.s32.totalorder %s28, 0
        %s299 = scalar_select %p298, %s28, 0
        %s300 = scalar_lea.vmem %s2, %s299
        %p301 = pneg %p118
        %p302 = pneg %p115
        %s303 = sand.u32 %s22, 1
        %s304 = scalar_lea.sflag [#allocation3], %s303
        %s305 = sand.u32 %s133, 1
        %s306 = smul.addr %s305, 128
        %s307 = scalar_lea.vmem [#allocation7], %s306
        %p308 = pneg %p146
        %p309 = pneg %p143
        %p310 = pneg %p174
        %p311 = pneg %p171
        %s312 = sand.u32 %s161, 1
        %s313 = scalar_lea.sflag [#allocation4], %s312
        %s314 = sand.u32 %s161, 1
        %s315 = smul.addr %s314, 256
        %s316 = scalar_lea.vmem [#allocation8], %s315
        %s317 = smul.u32 32, %s27
        %s318 = smul.u32 16, %s29
        %p319 = scmp.lt.s32.totalorder %s28, 0
        %s320 = scalar_select %p319, %s28, 0
        %s321 = scalar_lea.vmem %s2, %s320
        %s322 = smul.u32 32, %s27
        %s323 = smul.u32 32, %s27
        %v325 = vld [vmem:[%s271] sm:$0xf]
        %v326 = vld [vmem:[%s271 + $0x4] sm:$0xf]
        %v327 = vld [vmem:[%s271 + $0x8] sm:$0xf]
        %v328 = vld [vmem:[%s271 + $0xc] sm:$0xf]
        %v329 = vld [vmem:[%s271 + $0x10] sm:$0xf]
        %v330 = vld [vmem:[%s271 + $0x14] sm:$0xf]
        %v331 = vld [vmem:[%s271 + $0x18] sm:$0xf]
        %v332 = vld [vmem:[%s271 + $0x1c] sm:$0xf]
        %v333 = vld [vmem:[%s271 + $0x20] sm:$0xf]
        %v334 = vld [vmem:[%s271 + $0x24] sm:$0xf]
        %v335 = vld [vmem:[%s271 + $0x28] sm:$0xf]
        %v336 = vld [vmem:[%s271 + $0x2c] sm:$0xf]
        %v337 = vld [vmem:[%s271 + $0x30] sm:$0xf]
        %v338 = vld [vmem:[%s271 + $0x34] sm:$0xf]
        %v339 = vld [vmem:[%s271 + $0x38] sm:$0xf]
        %v340 = vld [vmem:[%s271 + $0x3c] sm:$0xf]
        %v341 = vld [vmem:[%s271 + $0x40] sm:$0xf]
        %v342 = vld [vmem:[%s271 + $0x44] sm:$0xf]
        %v343 = vld [vmem:[%s271 + $0x48] sm:$0xf]
        %v344 = vld [vmem:[%s271 + $0x4c] sm:$0xf]
        %v345 = vld [vmem:[%s271 + $0x50] sm:$0xf]
        %v346 = vld [vmem:[%s271 + $0x54] sm:$0xf]
        %v347 = vld [vmem:[%s271 + $0x58] sm:$0xf]
        %v348 = vld [vmem:[%s271 + $0x5c] sm:$0xf]
        %v349 = vld [vmem:[%s271 + $0x60] sm:$0xf]
        %v350 = vld [vmem:[%s271 + $0x64] sm:$0xf]
        %v351 = vld [vmem:[%s271 + $0x68] sm:$0xf]
        %v352 = vld [vmem:[%s271 + $0x6c] sm:$0xf]
        %v353 = vld [vmem:[%s271 + $0x70] sm:$0xf]
        %v354 = vld [vmem:[%s271 + $0x74] sm:$0xf]
        %v355 = vld [vmem:[%s271 + $0x78] sm:$0xf]
        %v356 = vld [vmem:[%s271 + $0x7c] sm:$0xf]
        %v357 = vld [vmem:[#allocation5] sm:$0xf]
        %v358 = vld [vmem:[#allocation5 + $0x4] sm:$0xf]
        %v359 = vld [vmem:[#allocation5 + $0x8] sm:$0xf]
        %v360 = vld [vmem:[#allocation5 + $0xc] sm:$0xf]
        %v361 = vld [vmem:[#allocation5 + $0x10] sm:$0xf]
        %v362 = vld [vmem:[#allocation5 + $0x14] sm:$0xf]
        %v363 = vld [vmem:[#allocation5 + $0x18] sm:$0xf]
        %v364 = vld [vmem:[#allocation5 + $0x1c] sm:$0xf]
        %v365 = vld [vmem:[#allocation5 + $0x20] sm:$0xf]
        %v366 = vld [vmem:[#allocation5 + $0x24] sm:$0xf]
        %v367 = vld [vmem:[#allocation5 + $0x28] sm:$0xf]
        %v368 = vld [vmem:[#allocation5 + $0x2c] sm:$0xf]
        %v369 = vld [vmem:[#allocation5 + $0x30] sm:$0xf]
        %v370 = vld [vmem:[#allocation5 + $0x34] sm:$0xf]
        %v371 = vld [vmem:[#allocation5 + $0x38] sm:$0xf]
        %v372 = vld [vmem:[#allocation5 + $0x3c] sm:$0xf]
        %v373 = vld [vmem:[%s321] sm:$0x1]
        %v375 = vlaneseq
        %v376 = vshrl.u32 %v375, 7
        %v377 = vsub.s32 0, %v376
        %v378 = vrot.slane %v373, %v377
        %v412 = vunpack.c.l.b16 %v325
        %v413 = vunpack.c.l.b16 %v326
        %v414 = vunpack.c.l.b16 %v327
        %v415 = vunpack.c.l.b16 %v328
        %v416 = vunpack.c.l.b16 %v329
        %v417 = vunpack.c.l.b16 %v330
        %v418 = vunpack.c.l.b16 %v331
        %v419 = vunpack.c.l.b16 %v332
        %v420 = vunpack.c.l.b16 %v333
        %v421 = vunpack.c.l.b16 %v334
        %v422 = vunpack.c.l.b16 %v335
        %v423 = vunpack.c.l.b16 %v336
        %v424 = vunpack.c.l.b16 %v337
        %v425 = vunpack.c.l.b16 %v338
        %v426 = vunpack.c.l.b16 %v339
        %v427 = vunpack.c.l.b16 %v340
        %v428 = vunpack.c.l.b16 %v341
        %v429 = vunpack.c.l.b16 %v342
        %v430 = vunpack.c.l.b16 %v343
        %v431 = vunpack.c.l.b16 %v344
        %v432 = vunpack.c.l.b16 %v345
        %v433 = vunpack.c.l.b16 %v346
        %v434 = vunpack.c.l.b16 %v347
        %v435 = vunpack.c.l.b16 %v348
        %v436 = vunpack.c.l.b16 %v349
        %v437 = vunpack.c.l.b16 %v350
        %v438 = vunpack.c.l.b16 %v351
        %v439 = vunpack.c.l.b16 %v352
        %v440 = vunpack.c.l.b16 %v353
        %v441 = vunpack.c.l.b16 %v354
        %v442 = vunpack.c.l.b16 %v355
        %v443 = vunpack.c.l.b16 %v356
        %v444 = vpack.c.b16 %v413, %v412
        %v445 = vpack.c.b16 %v415, %v414
        %v446 = vpack.c.b16 %v417, %v416
        %v447 = vpack.c.b16 %v419, %v418
        %v448 = vpack.c.b16 %v421, %v420
        %v449 = vpack.c.b16 %v423, %v422
        %v450 = vpack.c.b16 %v425, %v424
        %v451 = vpack.c.b16 %v427, %v426
        %v452 = vpack.c.b16 %v429, %v428
        %v453 = vpack.c.b16 %v431, %v430
        %v454 = vpack.c.b16 %v433, %v432
        %v455 = vpack.c.b16 %v435, %v434
        %v456 = vpack.c.b16 %v437, %v436
        %v457 = vpack.c.b16 %v439, %v438
        %v458 = vpack.c.b16 %v441, %v440
        %v459 = vpack.c.b16 %v443, %v442
        %v492 = vunpack.c.l.b16 %v357
        %v493 = vunpack.c.l.b16 %v358
        %v494 = vunpack.c.l.b16 %v359
        %v495 = vunpack.c.l.b16 %v360
        %v496 = vunpack.c.l.b16 %v361
        %v497 = vunpack.c.l.b16 %v362
        %v498 = vunpack.c.l.b16 %v363
        %v499 = vunpack.c.l.b16 %v364
        %v500 = vunpack.c.l.b16 %v365
        %v501 = vunpack.c.l.b16 %v366
        %v502 = vunpack.c.l.b16 %v367
        %v503 = vunpack.c.l.b16 %v368
        %v504 = vunpack.c.l.b16 %v369
        %v505 = vunpack.c.l.b16 %v370
        %v506 = vunpack.c.l.b16 %v371
        %v507 = vunpack.c.l.b16 %v372
        %v508 = vpack.c.b16 %v493, %v492
        %v509 = vpack.c.b16 %v495, %v494
        %v510 = vpack.c.b16 %v497, %v496
        %v511 = vpack.c.b16 %v499, %v498
        %v512 = vpack.c.b16 %v501, %v500
        %v513 = vpack.c.b16 %v503, %v502
        %v514 = vpack.c.b16 %v505, %v504
        %v515 = vpack.c.b16 %v507, %v506
        %524 = vmatprep.subr.bf16.mxu0 0
        %525 = vmatpush1.bf16.msra.mxu0 %v508
        %526 = vmatprep.subr.bf16.mxu0 0
        %527 = vmatpush1.bf16.msra.mxu0 %v509
        %528 = vmatprep.subr.bf16.mxu0 0
        %529 = vmatpush1.bf16.msra.mxu0 %v510
        %530 = vmatprep.subr.bf16.mxu0 0
        %531 = vmatpush1.bf16.msra.mxu0 %v511
        %532 = vmatprep.subr.bf16.mxu0 0
        %533 = vmatpush1.bf16.msra.mxu0 %v512
        %534 = vmatprep.subr.bf16.mxu0 0
        %535 = vmatpush1.bf16.msra.mxu0 %v513
        %536 = vmatprep.subr.bf16.mxu0 0
        %537 = vmatpush1.bf16.msra.mxu0 %v514
        %538 = vmatprep.subr.bf16.mxu0 0
        %539 = vmatpush1.bf16.msra.mxu0 %v515
        %540 = vmatprep.subr.bf16.mxu0 0
        %541 = vmatpush1.bf16.msra.mxu0 0
        %542 = vmatprep.subr.bf16.mxu0 0
        %543 = vmatpush1.bf16.msra.mxu0 0
        %544 = vmatprep.subr.bf16.mxu0 0
        %545 = vmatpush1.bf16.msra.mxu0 0
        %546 = vmatprep.subr.bf16.mxu0 0
        %547 = vmatpush1.bf16.msra.mxu0 0
        %548 = vmatprep.subr.bf16.mxu0 0
        %549 = vmatpush1.bf16.msra.mxu0 0
        %550 = vmatprep.subr.bf16.mxu0 0
        %551 = vmatpush1.bf16.msra.mxu0 0
        %552 = vmatprep.subr.bf16.mxu0 0
        %553 = vmatpush1.bf16.msra.mxu0 0
        %554 = vmatprep.subr.bf16.mxu0 0
        %555 = vmatpush1.bf16.msra.mxu0 0
        %556 = vmatprep.mubr.bf16.mxu0 0
        %557 = vmatmul.mubr.bf16.gmra.mrb[0].mxu0 %v444
        %v558 = vpop.f32.mrb[0].mxu0
        %v559 = vadd.f32 %v378, %v558
        %v560 = vpop.f32.mrb[0].mxu0
        %v561 = vpop.f32.mrb[0].mxu0
        %v562 = vadd.f32 %v378, %v561
        %v563 = vpop.f32.mrb[0].mxu0
        %564 = vmatprep.mubr.bf16.mxu0 0
        %565 = vmatmul.mubr.bf16.gmra.mrb[0].mxu0 %v445
        %v566 = vpop.f32.mrb[0].mxu0
        %v567 = vadd.f32 %v378, %v566
        %v568 = vpop.f32.mrb[0].mxu0
        %v569 = vpop.f32.mrb[0].mxu0
        %v570 = vadd.f32 %v378, %v569
        %v571 = vpop.f32.mrb[0].mxu0
        %572 = vmatprep.mubr.bf16.mxu0 0
        %573 = vmatmul.mubr.bf16.gmra.mrb[0].mxu0 %v446
        %v574 = vpop.f32.mrb[0].mxu0
        %v575 = vadd.f32 %v378, %v574
        %v576 = vpop.f32.mrb[0].mxu0
        %v577 = vpop.f32.mrb[0].mxu0
        %v578 = vadd.f32 %v378, %v577
        %v579 = vpop.f32.mrb[0].mxu0
        %580 = vmatprep.mubr.bf16.mxu0 0
        %581 = vmatmul.mubr.bf16.gmra.mrb[0].mxu0 %v447
        %v582 = vpop.f32.mrb[0].mxu0
        %v583 = vadd.f32 %v378, %v582
        %v584 = vpop.f32.mrb[0].mxu0
        %v585 = vpop.f32.mrb[0].mxu0
        %v586 = vadd.f32 %v378, %v585
        %v587 = vpop.f32.mrb[0].mxu0
        %588 = vmatprep.mubr.bf16.mxu0 0
        %589 = vmatmul.mubr.bf16.gmra.mrb[0].mxu0 %v448
        %v590 = vpop.f32.mrb[0].mxu0
        %v591 = vadd.f32 %v378, %v590
        %v592 = vpop.f32.mrb[0].mxu0
        %v593 = vpop.f32.mrb[0].mxu0
        %v594 = vadd.f32 %v378, %v593
        %v595 = vpop.f32.mrb[0].mxu0
        %596 = vmatprep.mubr.bf16.mxu0 0
        %597 = vmatmul.mubr.bf16.gmra.mrb[0].mxu0 %v449
        %v598 = vpop.f32.mrb[0].mxu0
        %v599 = vadd.f32 %v378, %v598
        %v600 = vpop.f32.mrb[0].mxu0
        %v601 = vpop.f32.mrb[0].mxu0
        %v602 = vadd.f32 %v378, %v601
        %v603 = vpop.f32.mrb[0].mxu0
        %604 = vmatprep.mubr.bf16.mxu0 0
        %605 = vmatmul.mubr.bf16.gmra.mrb[0].mxu0 %v450
        %v606 = vpop.f32.mrb[0].mxu0
        %v607 = vadd.f32 %v378, %v606
        %v608 = vpop.f32.mrb[0].mxu0
        %v609 = vpop.f32.mrb[0].mxu0
        %v610 = vadd.f32 %v378, %v609
        %v611 = vpop.f32.mrb[0].mxu0
        %612 = vmatprep.mubr.bf16.mxu0 0
        %613 = vmatmul.mubr.bf16.gmra.mrb[0].mxu0 %v451
        %v614 = vpop.f32.mrb[0].mxu0
        %v615 = vadd.f32 %v378, %v614
        %v616 = vpop.f32.mrb[0].mxu0
        %v617 = vpop.f32.mrb[0].mxu0
        %v618 = vadd.f32 %v378, %v617
        %v619 = vpop.f32.mrb[0].mxu0
        %620 = vmatprep.mubr.bf16.mxu0 0
        %621 = vmatmul.mubr.bf16.gmra.mrb[0].mxu0 %v452
        %v622 = vpop.f32.mrb[0].mxu0
        %v623 = vadd.f32 %v378, %v622
        %v624 = vpop.f32.mrb[0].mxu0
        %v625 = vpop.f32.mrb[0].mxu0
        %v626 = vadd.f32 %v378, %v625
        %v627 = vpop.f32.mrb[0].mxu0
        %628 = vmatprep.mubr.bf16.mxu0 0
        %629 = vmatmul.mubr.bf16.gmra.mrb[0].mxu0 %v453
        %v630 = vpop.f32.mrb[0].mxu0
        %v631 = vadd.f32 %v378, %v630
        %v632 = vpop.f32.mrb[0].mxu0
        %v633 = vpop.f32.mrb[0].mxu0
        %v634 = vadd.f32 %v378, %v633
        %v635 = vpop.f32.mrb[0].mxu0
        %636 = vmatprep.mubr.bf16.mxu0 0
        %637 = vmatmul.mubr.bf16.gmra.mrb[0].mxu0 %v454
        %v638 = vpop.f32.mrb[0].mxu0
        %v639 = vadd.f32 %v378, %v638
        %v640 = vpop.f32.mrb[0].mxu0
        %v641 = vpop.f32.mrb[0].mxu0
        %v642 = vadd.f32 %v378, %v641
        %v643 = vpop.f32.mrb[0].mxu0
        %644 = vmatprep.mubr.bf16.mxu0 0
        %645 = vmatmul.mubr.bf16.gmra.mrb[0].mxu0 %v455
        %v646 = vpop.f32.mrb[0].mxu0
        %v647 = vadd.f32 %v378, %v646
        %v648 = vpop.f32.mrb[0].mxu0
        %v649 = vpop.f32.mrb[0].mxu0
        %v650 = vadd.f32 %v378, %v649
        %v651 = vpop.f32.mrb[0].mxu0
        %652 = vmatprep.mubr.bf16.mxu0 0
        %653 = vmatmul.mubr.bf16.gmra.mrb[0].mxu0 %v456
        %v654 = vpop.f32.mrb[0].mxu0
        %v655 = vadd.f32 %v378, %v654
        %v656 = vpop.f32.mrb[0].mxu0
        %v657 = vpop.f32.mrb[0].mxu0
        %v658 = vadd.f32 %v378, %v657
        %v659 = vpop.f32.mrb[0].mxu0
        %660 = vmatprep.mubr.bf16.mxu0 0
        %661 = vmatmul.mubr.bf16.gmra.mrb[0].mxu0 %v457
        %v662 = vpop.f32.mrb[0].mxu0
        %v663 = vadd.f32 %v378, %v662
        %v664 = vpop.f32.mrb[0].mxu0
        %v665 = vpop.f32.mrb[0].mxu0
        %v666 = vadd.f32 %v378, %v665
        %v667 = vpop.f32.mrb[0].mxu0
        %668 = vmatprep.mubr.bf16.mxu0 0
        %669 = vmatmul.mubr.bf16.gmra.mrb[0].mxu0 %v458
        %v670 = vpop.f32.mrb[0].mxu0
        %v671 = vadd.f32 %v378, %v670
        %v672 = vpop.f32.mrb[0].mxu0
        %v673 = vpop.f32.mrb[0].mxu0
        %v674 = vadd.f32 %v378, %v673
        %v675 = vpop.f32.mrb[0].mxu0
        %676 = vmatprep.mubr.bf16.mxu0 0
        %677 = vmatmul.mubr.bf16.gmra.mrb[0].mxu0 %v459
        %v678 = vpop.f32.mrb[0].mxu0
        %v679 = vadd.f32 %v378, %v678
        %v680 = vpop.f32.mrb[0].mxu0
        %v681 = vpop.f32.mrb[0].mxu0
        %v682 = vadd.f32 %v378, %v681
        %v683 = vpop.f32.mrb[0].mxu0
        %684 = vdwg.mxu0
        %v685 = vld [vmem:[%s284] sm:$0xf]
        %v686 = vld [vmem:[%s284 + $0x4] sm:$0xf]
        %v687 = vld [vmem:[%s284 + $0x8] sm:$0xf]
        %v688 = vld [vmem:[%s284 + $0xc] sm:$0xf]
        %v689 = vld [vmem:[%s284 + $0x10] sm:$0xf]
        %v690 = vld [vmem:[%s284 + $0x14] sm:$0xf]
        %v691 = vld [vmem:[%s284 + $0x18] sm:$0xf]
        %v692 = vld [vmem:[%s284 + $0x1c] sm:$0xf]
        %v693 = vld [vmem:[%s284 + $0x20] sm:$0xf]
        %v694 = vld [vmem:[%s284 + $0x24] sm:$0xf]
        %v695 = vld [vmem:[%s284 + $0x28] sm:$0xf]
        %v696 = vld [vmem:[%s284 + $0x2c] sm:$0xf]
        %v697 = vld [vmem:[%s284 + $0x30] sm:$0xf]
        %v698 = vld [vmem:[%s284 + $0x34] sm:$0xf]
        %v699 = vld [vmem:[%s284 + $0x38] sm:$0xf]
        %v700 = vld [vmem:[%s284 + $0x3c] sm:$0xf]
        %v701 = vld [vmem:[%s284 + $0x40] sm:$0xf]
        %v702 = vld [vmem:[%s284 + $0x44] sm:$0xf]
        %v703 = vld [vmem:[%s284 + $0x48] sm:$0xf]
        %v704 = vld [vmem:[%s284 + $0x4c] sm:$0xf]
        %v705 = vld [vmem:[%s284 + $0x50] sm:$0xf]
        %v706 = vld [vmem:[%s284 + $0x54] sm:$0xf]
        %v707 = vld [vmem:[%s284 + $0x58] sm:$0xf]
        %v708 = vld [vmem:[%s284 + $0x5c] sm:$0xf]
        %v709 = vld [vmem:[%s284 + $0x60] sm:$0xf]
        %v710 = vld [vmem:[%s284 + $0x64] sm:$0xf]
        %v711 = vld [vmem:[%s284 + $0x68] sm:$0xf]
        %v712 = vld [vmem:[%s284 + $0x6c] sm:$0xf]
        %v713 = vld [vmem:[%s284 + $0x70] sm:$0xf]
        %v714 = vld [vmem:[%s284 + $0x74] sm:$0xf]
        %v715 = vld [vmem:[%s284 + $0x78] sm:$0xf]
        %v716 = vld [vmem:[%s284 + $0x7c] sm:$0xf]
        %v717 = vunpack.c.l.bf16 %v685
        %v718 = vunpack.c.l.bf16 %v686
        %v719 = vunpack.c.l.bf16 %v687
        %v720 = vunpack.c.l.bf16 %v688
        %v721 = vunpack.c.l.bf16 %v689
        %v722 = vunpack.c.l.bf16 %v690
        %v723 = vunpack.c.l.bf16 %v691
        %v724 = vunpack.c.l.bf16 %v692
        %v725 = vunpack.c.l.bf16 %v693
        %v726 = vunpack.c.l.bf16 %v694
        %v727 = vunpack.c.l.bf16 %v695
        %v728 = vunpack.c.l.bf16 %v696
        %v729 = vunpack.c.l.bf16 %v697
        %v730 = vunpack.c.l.bf16 %v698
        %v731 = vunpack.c.l.bf16 %v699
        %v732 = vunpack.c.l.bf16 %v700
        %v733 = vunpack.c.l.bf16 %v701
        %v734 = vunpack.c.l.bf16 %v702
        %v735 = vunpack.c.l.bf16 %v703
        %v736 = vunpack.c.l.bf16 %v704
        %v737 = vunpack.c.l.bf16 %v705
        %v738 = vunpack.c.l.bf16 %v706
        %v739 = vunpack.c.l.bf16 %v707
        %v740 = vunpack.c.l.bf16 %v708
        %v741 = vunpack.c.l.bf16 %v709
        %v742 = vunpack.c.l.bf16 %v710
        %v743 = vunpack.c.l.bf16 %v711
        %v744 = vunpack.c.l.bf16 %v712
        %v745 = vunpack.c.l.bf16 %v713
        %v746 = vunpack.c.l.bf16 %v714
        %v747 = vunpack.c.l.bf16 %v715
        %v748 = vunpack.c.l.bf16 %v716
        %v749 = vadd.f32 %v559, %v717
        %v750 = vadd.f32 %v562, %v718
        %v751 = vadd.f32 %v567, %v719
        %v752 = vadd.f32 %v570, %v720
        %v753 = vadd.f32 %v575, %v721
        %v754 = vadd.f32 %v578, %v722
        %v755 = vadd.f32 %v583, %v723
        %v756 = vadd.f32 %v586, %v724
        %v757 = vadd.f32 %v591, %v725
        %v758 = vadd.f32 %v594, %v726
        %v759 = vadd.f32 %v599, %v727
        %v760 = vadd.f32 %v602, %v728
        %v761 = vadd.f32 %v607, %v729
        %v762 = vadd.f32 %v610, %v730
        %v763 = vadd.f32 %v615, %v731
        %v764 = vadd.f32 %v618, %v732
        %v765 = vadd.f32 %v623, %v733
        %v766 = vadd.f32 %v626, %v734
        %v767 = vadd.f32 %v631, %v735
        %v768 = vadd.f32 %v634, %v736
        %v769 = vadd.f32 %v639, %v737
        %v770 = vadd.f32 %v642, %v738
        %v771 = vadd.f32 %v647, %v739
        %v772 = vadd.f32 %v650, %v740
        %v773 = vadd.f32 %v655, %v741
        %v774 = vadd.f32 %v658, %v742
        %v775 = vadd.f32 %v663, %v743
        %v776 = vadd.f32 %v666, %v744
        %v777 = vadd.f32 %v671, %v745
        %v778 = vadd.f32 %v674, %v746
        %v779 = vadd.f32 %v679, %v747
        %v780 = vadd.f32 %v682, %v748
        %v781 = vmax.f32 %v749, 0.0
        %v782 = vmax.f32 %v750, 0.0
        %v783 = vmax.f32 %v751, 0.0
        %v784 = vmax.f32 %v752, 0.0
        %v785 = vmax.f32 %v753, 0.0
        %v786 = vmax.f32 %v754, 0.0
        %v787 = vmax.f32 %v755, 0.0
        %v788 = vmax.f32 %v756, 0.0
        %v789 = vmax.f32 %v757, 0.0
        %v790 = vmax.f32 %v758, 0.0
        %v791 = vmax.f32 %v759, 0.0
        %v792 = vmax.f32 %v760, 0.0
        %v793 = vmax.f32 %v761, 0.0
        %v794 = vmax.f32 %v762, 0.0
        %v795 = vmax.f32 %v763, 0.0
        %v796 = vmax.f32 %v764, 0.0
        %v797 = vmax.f32 %v765, 0.0
        %v798 = vmax.f32 %v766, 0.0
        %v799 = vmax.f32 %v767, 0.0
        %v800 = vmax.f32 %v768, 0.0
        %v801 = vmax.f32 %v769, 0.0
        %v802 = vmax.f32 %v770, 0.0
        %v803 = vmax.f32 %v771, 0.0
        %v804 = vmax.f32 %v772, 0.0
        %v805 = vmax.f32 %v773, 0.0
        %v806 = vmax.f32 %v774, 0.0
        %v807 = vmax.f32 %v775, 0.0
        %v808 = vmax.f32 %v776, 0.0
        %v809 = vmax.f32 %v777, 0.0
        %v810 = vmax.f32 %v778, 0.0
        %v811 = vmax.f32 %v779, 0.0
        %v812 = vmax.f32 %v780, 0.0
        %813 = vst [vmem:[%s316] sm:$0xff] %v781
        %814 = vst [vmem:[%s316 + $0x8] sm:$0xff] %v782
        %815 = vst [vmem:[%s316 + $0x10] sm:$0xff] %v783
        %816 = vst [vmem:[%s316 + $0x18] sm:$0xff] %v784
        %817 = vst [vmem:[%s316 + $0x20] sm:$0xff] %v785
        %818 = vst [vmem:[%s316 + $0x28] sm:$0xff] %v786
        %819 = vst [vmem:[%s316 + $0x30] sm:$0xff] %v787
        %820 = vst [vmem:[%s316 + $0x38] sm:$0xff] %v788
        %821 = vst [vmem:[%s316 + $0x40] sm:$0xff] %v789
        %822 = vst [vmem:[%s316 + $0x48] sm:$0xff] %v790
        %823 = vst [vmem:[%s316 + $0x50] sm:$0xff] %v791
        %824 = vst [vmem:[%s316 + $0x58] sm:$0xff] %v792
        %825 = vst [vmem:[%s316 + $0x60] sm:$0xff] %v793
        %826 = vst [vmem:[%s316 + $0x68] sm:$0xff] %v794
        %827 = vst [vmem:[%s316 + $0x70] sm:$0xff] %v795
        %828 = vst [vmem:[%s316 + $0x78] sm:$0xff] %v796
        %829 = vst [vmem:[%s316 + $0x80] sm:$0xff] %v797
        %830 = vst [vmem:[%s316 + $0x88] sm:$0xff] %v798
        %831 = vst [vmem:[%s316 + $0x90] sm:$0xff] %v799
        %832 = vst [vmem:[%s316 + $0x98] sm:$0xff] %v800
        %833 = vst [vmem:[%s316 + $0xa0] sm:$0xff] %v801
        %834 = vst [vmem:[%s316 + $0xa8] sm:$0xff] %v802
        %835 = vst [vmem:[%s316 + $0xb0] sm:$0xff] %v803
        %836 = vst [vmem:[%s316 + $0xb8] sm:$0xff] %v804
        %837 = vst [vmem:[%s316 + $0xc0] sm:$0xff] %v805
        %838 = vst [vmem:[%s316 + $0xc8] sm:$0xff] %v806
        %839 = vst [vmem:[%s316 + $0xd0] sm:$0xff] %v807
        %840 = vst [vmem:[%s316 + $0xd8] sm:$0xff] %v808
        %841 = vst [vmem:[%s316 + $0xe0] sm:$0xff] %v809
        %842 = vst [vmem:[%s316 + $0xe8] sm:$0xff] %v810
        %843 = vst [vmem:[%s316 + $0xf0] sm:$0xff] %v811
        %844 = vst [vmem:[%s316 + $0xf8] sm:$0xff] %v812
        %s845 = sand.u32 %s161, 1
        %s846 = scalar_lea.sflag [#allocation4], %s845
        %s847 = sand.u32 %s161, 1
        %s848 = smul.addr %s847, 256
        %s849 = scalar_lea.vmem [#allocation8], %s848
        // Predicated region
        $region49: #{tpu_custom_call.1} parent=35 // pred_check
          %p850 = pneg %p171
        $region50: #{tpu_custom_call.1} parent=35 // pred_check_branch
          %852 = sbr.rel (%p850) target = $region52
        $region51: #{tpu_custom_call.1} parent=35 // pred_region
          %s853 = smul.u32 32, %s27
          %s855 = ssub.s32 4096, 4096
          %856 = vsyncadd %s846, %s855
          %s857 = sadd.s32 %s28, %s853
          %s858 = smul.addr %s857, 128
          %s859 = scalar_lea.hbm %s4, %s858
          %s860 = sshll.u32 %s849, 4
          %s861 = int_to_ptr.vmem [resolvable:$true] %s860
          %866 = dma.vmem_to_hbm [thread:$0]  %s861, 4096, %s859, %s846, 128, 128, 8
        $region52: #{tpu_custom_call.1} parent=35 // pred_fallthru
          _
      $region36: #{tpu_custom_call.1} parent=5 // pred_fallthru
        _
      %p867 = scmp.le.s32.totalorder 2, %s17
      // Predicated region
      $region53: #{tpu_custom_call.1} parent=5 // pred_check
        %p868 = pneg %p867
      $region54: #{tpu_custom_call.1} parent=5 // pred_check_branch
        %870 = sbr.rel (%p868) target = $region56
      $region55: #{tpu_custom_call.1} parent=5 // pred_region
        %s871 = ssub.s32 %s17, 2
        // Predicated region
        $region57: #{tpu_custom_call.1} parent=55 // pred_check
          %p872 = pneg %p177
        $region58: #{tpu_custom_call.1} parent=55 // pred_check_branch
          %874 = sbr.rel (%p872) target = $region60
        $region59: #{tpu_custom_call.1} parent=55 // pred_region
          %s875 = sand.u32 %s162, 1
          %s876 = scalar_lea.sflag [#allocation4], %s875
          %s877 = sand.u32 %s162, 1
          %s878 = smul.addr %s877, 256
          %s879 = scalar_lea.vmem [#allocation8], %s878
          %880 = dma.done %s876, 4096
        $region60: #{tpu_custom_call.1} parent=55 // pred_fallthru
          _
      $region56: #{tpu_custom_call.1} parent=5 // pred_fallthru
        _
    $region6: #{tpu_custom_call.1} parent=1 // loop_footer
      %s21 = sadd.s32 1, %s17
    $region7: #{tpu_custom_call.1} parent=1 // loop_footer_branch
      %16 = sbr.rel target = $region3
    $region8: #{tpu_custom_call.1} parent=1 // loop_exit
      _
    %881 = vsyncpa [#allocation3], 1
    %s882 = scalar_lea.sflag [#allocation3], 1
    %883 = vsyncpa %s882, 1
    %884 = vsyncpa [#allocation6], 1
    %885 = vsyncpa [#allocation4], 1
    %s886 = scalar_lea.sflag [#allocation4], 1
    %887 = vsyncpa %s886, 1

</llo_original>
